<compile_context>
chip_gen: v6e
topology: v6e:2x2x1
jax: 0.10.0
libtpu: 0.0.40
codegen_flags: <defaults>
</compile_context>

<pallas_src>
import jax
import jax.numpy as jnp
from jax.experimental import pallas as pl
from jax.experimental.pallas import tpu as pltpu

HIDDEN = 64                  # per-branch hidden size (fixed by the module)
PACKED_H = 2 * HIDDEN        # actor+critic hidden packed on the lane axis = 128
TB_MAX = 8192                # max batch-tile rows (amortize per-step overhead)
VMEM_BUDGET = 10 * 1024 * 1024   # bytes for pipelined buffers (safe on v5e/v6e/v7x)


def _round_up(x, m):
    return ((x + m - 1) // m) * m


def _gen_fc_kernel(x_ref, w1_ref, b1_ref, w2_ref, b2_ref, out_ref):
    """One batch tile: out = (tanh(x @ W1_cat + b1_cat)) @ W2_cat + b2_cat."""
    x = x_ref[...]
    h = jnp.tanh(
        jnp.dot(x, w1_ref[...], preferred_element_type=jnp.float32) + b1_ref[...]
    )
    out = jnp.dot(h, w2_ref[...], preferred_element_type=jnp.float32) + b2_ref[...]
    out_ref[...] = out.astype(out_ref.dtype)


def pack_gen_fc_params(aw1, ab1, aw2, ab2, cw1, cb1, cw2, cb2):
    """One-time parameter prep: pack actor + critic into single 128-lane layers.

    Weights are stored pre-transposed as [in_features, out_features]; biases [1, out].
    Returns (w1_cat [in,128], b1_cat [1,128], w2_cat [128,out_dim+1],
             b2_cat [1,out_dim+1]).  Call once and reuse across forward calls.
    """
    out_dim = aw2.shape[1]
    out_w = out_dim + 1                                       # narrow output: logits + value

    w1_cat = jnp.concatenate([aw1, cw1], axis=1)              # [input_dim, 128]
    b1_cat = jnp.concatenate([ab1, cb1], axis=1)              # [1, 128]

    w2_cat = jnp.zeros((PACKED_H, out_w), jnp.float32)
    w2_cat = w2_cat.at[:HIDDEN, :out_dim].set(aw2)            # actor head
    w2_cat = w2_cat.at[HIDDEN:, out_dim:out_w].set(cw2)       # critic head
    b2_cat = jnp.zeros((1, out_w), jnp.float32)
    b2_cat = b2_cat.at[:, :out_dim].set(ab2)
    b2_cat = b2_cat.at[:, out_dim:out_w].set(cb2)
    return w1_cat, b1_cat, w2_cat, b2_cat


def _choose_tile(B, input_dim, out_w):
    """Balanced, VMEM-aware batch tile size and padded batch."""
    # Pipelined (double-buffered) bytes per batch row: obs tile + output tile, f32.
    row_bytes = 2 * (input_dim + out_w) * 4
    # Resident weights/biases (assume double-buffered to be conservative).
    weight_bytes = 2 * 4 * (input_dim * PACKED_H + PACKED_H + PACKED_H * out_w + out_w)
    avail = max(VMEM_BUDGET - weight_bytes, 8 * row_bytes)
    tb_cap = max(8, min(TB_MAX, (avail // row_bytes) // 8 * 8))

    num_steps = pl.cdiv(B, tb_cap)
    # v7x megacore: keep >=2 grid steps for mid/large batches so the "parallel"
    # batch axis shards across both TensorCores (no-op cost on v5e/v6e).
    if B > 1024:
        num_steps = max(num_steps, 2)
    tb = min(tb_cap, _round_up(pl.cdiv(B, num_steps), 8))
    b_pad = _round_up(B, tb)
    return tb, b_pad


@jax.jit
def gen_fc_forward(obs, w1_cat, b1_cat, w2_cat, b2_cat):
    """obs: [B, input_dim] f32; packed params from pack_gen_fc_params.

    Returns (actor_logits [B, out_dim], value [B, 1]).
    """
    B, input_dim = obs.shape
    out_w = w2_cat.shape[1]           # out_dim + 1
    out_dim = out_w - 1

    tb, b_pad = _choose_tile(B, input_dim, out_w)
    if b_pad != B:
        obs = jnp.pad(obs, ((0, b_pad - B), (0, 0)))
    grid = (b_pad // tb,)

    resident = lambda i: (0, 0)   # weights/biases: same block every step -> VMEM-resident
    out_slab = pl.pallas_call(
        _gen_fc_kernel,
        out_shape=jax.ShapeDtypeStruct((b_pad, out_w), jnp.float32),
        grid=grid,
        in_specs=[
            pl.BlockSpec((tb, input_dim), lambda i: (i, 0)),       # obs tile
            pl.BlockSpec((input_dim, PACKED_H), resident),         # W1_cat
            pl.BlockSpec((1, PACKED_H), resident),                 # b1_cat
            pl.BlockSpec((PACKED_H, out_w), resident),             # W2_cat
            pl.BlockSpec((1, out_w), resident),                    # b2_cat
        ],
        # Narrow output: block last-dim equals the full array last-dim, so the
        # (8,128) rule is satisfied while HBM writeback stays ~14x smaller than
        # a 128-lane f32 slab.
        out_specs=pl.BlockSpec((tb, out_w), lambda i: (i, 0)),
        compiler_params=pltpu.CompilerParams(
            dimension_semantics=("parallel",),
        ),
    )(obs, w1_cat, b1_cat, w2_cat, b2_cat)

    logits = out_slab[:B, :out_dim]
    value = out_slab[:B, out_dim:out_w]
    return logits, value


def _xavier_uniform(key, shape):
    """Xavier/Glorot uniform for a [in, out] weight (matches the fan_in/fan_out
    of the corresponding PyTorch [out, in] Linear weight)."""
    fan_in, fan_out = shape[0], shape[1]
    limit = jnp.sqrt(6.0 / (fan_in + fan_out))
    return jax.random.uniform(key, shape, jnp.float32, minval=-limit, maxval=limit)


def init_gen_fc_params(key, input_dim, output_dim, hidden=HIDDEN):
    """Deterministic synthetic params (weights stored as [in, out])."""
    keys = jax.random.split(key, 8)
    aw1 = _xavier_uniform(keys[0], (input_dim, hidden))
    ab1 = jax.random.uniform(keys[1], (1, hidden), jnp.float32, -0.1, 0.1)
    aw2 = _xavier_uniform(keys[2], (hidden, output_dim))
    ab2 = jax.random.uniform(keys[3], (1, output_dim), jnp.float32, -0.1, 0.1)
    cw1 = _xavier_uniform(keys[4], (input_dim, hidden))
    cb1 = jax.random.uniform(keys[5], (1, hidden), jnp.float32, -0.1, 0.1)
    cw2 = _xavier_uniform(keys[6], (hidden, 1))
    cb2 = jax.random.uniform(keys[7], (1, 1), jnp.float32, -0.1, 0.1)
    return aw1, ab1, aw2, ab2, cw1, cb1, cw2, cb2


if __name__ == "__main__":
    key = jax.random.PRNGKey(0)
    k_params, k_obs, k_obs2 = jax.random.split(key, 3)

    batch = 2
    input_dim = 32
    output_dim = 8

    params = init_gen_fc_params(k_params, input_dim, output_dim)
    aw1, ab1, aw2, ab2, cw1, cb1, cw2, cb2 = params

    # One-time parameter prep (hoisted out of the per-call forward).
    packed = pack_gen_fc_params(*params)
    packed = jax.block_until_ready(packed)

    # Small-batch check (batch < tile, padded internally).
    obs = jax.random.normal(k_obs, (batch, input_dim), jnp.float32)
    logits, value = gen_fc_forward(obs, *packed)
    jax.block_until_ready((logits, value))

    ref_logits = jnp.tanh(obs @ aw1 + ab1) @ aw2 + ab2
    ref_value = jnp.tanh(obs @ cw1 + cb1) @ cw2 + cb2
    assert logits.shape == (batch, output_dim)
    assert value.shape == (batch, 1)
    assert jnp.allclose(logits, ref_logits, atol=2e-5)
    assert jnp.allclose(value, ref_value, atol=2e-5)

    # Multi-tile check (grid >= 2, balanced tiles, exercises the pipelined path
    # and the megacore-friendly >=2-step split).
    big_batch = 4096 + 17   # non-multiple of the tile to exercise padding
    obs_big = jax.random.normal(k_obs2, (big_batch, input_dim), jnp.float32)
    logits_b, value_b = gen_fc_forward(obs_big, *packed)
    jax.block_until_ready((logits_b, value_b))

    ref_logits_b = jnp.tanh(obs_big @ aw1 + ab1) @ aw2 + ab2
    ref_value_b = jnp.tanh(obs_big @ cw1 + cb1) @ cw2 + cb2
    assert logits_b.shape == (big_batch, output_dim)
    assert value_b.shape == (big_batch, 1)
    assert jnp.allclose(logits_b, ref_logits_b, atol=2e-5)
    assert jnp.allclose(value_b, ref_value_b, atol=2e-5)

    print("KERNEL_OK")
</pallas_src>

<mosaic_0001>
module attributes {stable_mosaic.version = 11 : i64} {
  func.func @_gen_fc_kernel(%arg0: i32, %arg1: memref<8x32xf32, #tpu.memory_space<vmem>>, %arg2: memref<32x128xf32, #tpu.memory_space<vmem>>, %arg3: memref<1x128xf32, #tpu.memory_space<vmem>>, %arg4: memref<128x9xf32, #tpu.memory_space<vmem>>, %arg5: memref<1x9xf32, #tpu.memory_space<vmem>>, %arg6: memref<8x9xf32, #tpu.memory_space<vmem>>) attributes {dimension_semantics = [#tpu.dimension_semantics<parallel>], iteration_bounds = array<i64: 1>, scalar_prefetch = 0 : i64, scratch_operands = 0 : i64, tpu.core_type = #tpu.core_type<tc>, window_params = [{transform_indices = @transform_0, window_bounds = array<i64: 8, 32>}, {pipeline_mode = #tpu.pipeline_mode<synchronous>, transform_indices = @transform_1, window_bounds = array<i64: 32, 128>}, {pipeline_mode = #tpu.pipeline_mode<synchronous>, transform_indices = @transform_2, window_bounds = array<i64: 1, 128>}, {pipeline_mode = #tpu.pipeline_mode<synchronous>, transform_indices = @transform_3, window_bounds = array<i64: 128, 9>}, {pipeline_mode = #tpu.pipeline_mode<synchronous>, transform_indices = @transform_4, window_bounds = array<i64: 1, 9>}, {transform_indices = @transform_5, window_bounds = array<i64: 8, 9>}]} {
    %c0 = arith.constant 0 : index
    %c0_0 = arith.constant 0 : index
    %0 = vector.load %arg1[%c0, %c0_0] : memref<8x32xf32, #tpu.memory_space<vmem>>, vector<8x32xf32>
    %c0_1 = arith.constant 0 : index
    %c0_2 = arith.constant 0 : index
    %1 = vector.load %arg2[%c0_1, %c0_2] : memref<32x128xf32, #tpu.memory_space<vmem>>, vector<32x128xf32>
    %cst = arith.constant dense<0.000000e+00> : vector<8x128xf32>
    %2 = tpu.matmul %0, %1, %cst {dimension_numbers = #tpu.dot_dimension_numbers<[1], [0], [0], [1], [0, 0, 1, 1], [], []>} : vector<8x32xf32>, vector<32x128xf32>, vector<8x128xf32> -> vector<8x128xf32>
    %c0_3 = arith.constant 0 : index
    %c0_4 = arith.constant 0 : index
    %3 = vector.load %arg3[%c0_3, %c0_4] : memref<1x128xf32, #tpu.memory_space<vmem>>, vector<1x128xf32>
    %4 = vector.broadcast %3 : vector<1x128xf32> to vector<8x128xf32>
    %5 = arith.addf %2, %4 : vector<8x128xf32>
    %6 = math.tanh %5 : vector<8x128xf32>
    %c0_5 = arith.constant 0 : index
    %c0_6 = arith.constant 0 : index
    %7 = vector.load %arg4[%c0_5, %c0_6] : memref<128x9xf32, #tpu.memory_space<vmem>>, vector<128x9xf32>
    %cst_7 = arith.constant dense<0.000000e+00> : vector<8x9xf32>
    %8 = tpu.matmul %6, %7, %cst_7 {dimension_numbers = #tpu.dot_dimension_numbers<[1], [0], [0], [1], [0, 0, 1, 1], [], []>} : vector<8x128xf32>, vector<128x9xf32>, vector<8x9xf32> -> vector<8x9xf32>
    %c0_8 = arith.constant 0 : index
    %c0_9 = arith.constant 0 : index
    %9 = vector.load %arg5[%c0_8, %c0_9] : memref<1x9xf32, #tpu.memory_space<vmem>>, vector<1x9xf32>
    %10 = vector.broadcast %9 : vector<1x9xf32> to vector<8x9xf32>
    %11 = arith.addf %8, %10 : vector<8x9xf32>
    %c0_10 = arith.constant 0 : index
    %c0_11 = arith.constant 0 : index
    %12 = vector.load %arg6[%c0_10, %c0_11] : memref<8x9xf32, #tpu.memory_space<vmem>>, vector<8x9xf32>
    tpu.vector_store %arg6[%c0_10, %c0_11], %11 {strides = array<i32>} : memref<8x9xf32, #tpu.memory_space<vmem>>, vector<8x9xf32>,
    return
  }
  func.func @transform_0(%arg0: i32) -> (i32, i32) {
    %c0_i32 = arith.constant 0 : i32
    %c0_i32_0 = arith.constant 0 : i32
    return %arg0, %c0_i32 : i32, i32
  }
  func.func @transform_1(%arg0: i32) -> (i32, i32) {
    %c0_i32 = arith.constant 0 : i32
    %c0_i32_0 = arith.constant 0 : i32
    %c0_i32_1 = arith.constant 0 : i32
    return %c0_i32, %c0_i32_0 : i32, i32
  }
  func.func @transform_2(%arg0: i32) -> (i32, i32) {
    %c0_i32 = arith.constant 0 : i32
    %c0_i32_0 = arith.constant 0 : i32
    %c0_i32_1 = arith.constant 0 : i32
    return %c0_i32, %c0_i32_0 : i32, i32
  }
  func.func @transform_3(%arg0: i32) -> (i32, i32) {
    %c0_i32 = arith.constant 0 : i32
    %c0_i32_0 = arith.constant 0 : i32
    %c0_i32_1 = arith.constant 0 : i32
    return %c0_i32, %c0_i32_0 : i32, i32
  }
  func.func @transform_4(%arg0: i32) -> (i32, i32) {
    %c0_i32 = arith.constant 0 : i32
    %c0_i32_0 = arith.constant 0 : i32
    %c0_i32_1 = arith.constant 0 : i32
    return %c0_i32, %c0_i32_0 : i32, i32
  }
  func.func @transform_5(%arg0: i32) -> (i32, i32) {
    %c0_i32 = arith.constant 0 : i32
    %c0_i32_0 = arith.constant 0 : i32
    return %arg0, %c0_i32 : i32, i32
  }
}

</mosaic_0001>

<llo_original>
// kernel: gen_fc_forward.1
$region0: #{gen_fc_forward.1}
  #allocation0 [shape = 'u32[]', space=smem, size = 0x4, offset = 0x4, fixed_abs, tag = 'smem constant byte address 0x4 - core index']
  #allocation1 [shape = 'u32[144,128]{1,0:T(1,128)}', space=vmem, size = 0x12000, scoped, tag = 'internal scratch']
  %s0 = inlined_call_operand.vmem [shape: f32[8,32], index: 0, kind: input, shape index: {}]
  %s1 = inlined_call_operand.vmem [shape: f32[32,128], index: 1, kind: input, shape index: {}]
  %s2 = inlined_call_operand.vmem [shape: f32[1,128], index: 2, kind: input, shape index: {}]
  %s3 = inlined_call_operand.vmem [shape: f32[128,9], index: 3, kind: input, shape index: {}]
  %s4 = inlined_call_operand.vmem [shape: f32[1,9], index: 4, kind: input, shape index: {}]
  %s5 = inlined_call_operand.vmem [shape: f32[8,9], index: 5, kind: output, shape index: {}]
  %s6 = sld [smem:[#allocation0]]
  $region30: #{gen_fc_forward.1} parent=0
    _
  %s8 = ssub.s32 1, %s6
  %s9 = scalar_select 0, %s8, %s6
  // Predicated region
  $region2: #{gen_fc_forward.1} parent=0 // pred_check
    _
  $region3: #{gen_fc_forward.1} parent=0 // pred_check_branch
    %11 = sbr.rel (0) target = $region5
  $region4: #{gen_fc_forward.1} parent=0 // pred_region
    _
  $region5: #{gen_fc_forward.1} parent=0 // pred_fallthru
    _
  // Predicated region
  $region6: #{gen_fc_forward.1} parent=0 // pred_check
    _
  $region7: #{gen_fc_forward.1} parent=0 // pred_check_branch
    %13 = sbr.rel (0) target = $region9
  $region8: #{gen_fc_forward.1} parent=0 // pred_region
    _
  $region9: #{gen_fc_forward.1} parent=0 // pred_fallthru
    _
  // Predicated region
  $region10: #{gen_fc_forward.1} parent=0 // pred_check
    _
  $region11: #{gen_fc_forward.1} parent=0 // pred_check_branch
    %15 = sbr.rel (0) target = $region13
  $region12: #{gen_fc_forward.1} parent=0 // pred_region
    _
  $region13: #{gen_fc_forward.1} parent=0 // pred_fallthru
    _
  // Predicated region
  $region14: #{gen_fc_forward.1} parent=0 // pred_check
    _
  $region15: #{gen_fc_forward.1} parent=0 // pred_check_branch
    %17 = sbr.rel (0) target = $region17
  $region16: #{gen_fc_forward.1} parent=0 // pred_region
    _
  $region17: #{gen_fc_forward.1} parent=0 // pred_fallthru
    _
  // Predicated region
  $region18: #{gen_fc_forward.1} parent=0 // pred_check
    _
  $region19: #{gen_fc_forward.1} parent=0 // pred_check_branch
    %19 = sbr.rel (0) target = $region21
  $region20: #{gen_fc_forward.1} parent=0 // pred_region
    _
  $region21: #{gen_fc_forward.1} parent=0 // pred_fallthru
    _
  %v20 = vld [vmem:[%s0] sm:$0xff]
  %v21 = vld [vmem:[%s1] sm:$0xff]
  %v22 = vld [vmem:[%s1 + $0x8] sm:$0xff]
  %v23 = vld [vmem:[%s1 + $0x10] sm:$0xff]
  %v24 = vld [vmem:[%s1 + $0x18] sm:$0xff]
  %v25 = vld [vmem:[%s2] sm:$0x1]
  %v27 = vlaneseq
  %v28 = vshrl.u32 %v27, 7
  %v29 = vsub.s32 0, %v28
  %v30 = vrot.slane %v25, %v29
  %vm32 = vcmask 261120
  %v34 = vsel %vm32, %v20, 0
  %36 = vmatprep.subr.mxu0 0.0
  %37 = vmatpush1.msra.mxu0 0.0
  %38 = vmatprep.subr.mxu0 0.0
  %39 = vmatpush1.msra.mxu0 0.0
  %40 = vmatprep.subr.mxu0 0.0
  %41 = vmatpush1.msra.mxu0 0.0
  %42 = vmatprep.subr.mxu0 0.0
  %43 = vmatpush1.msra.mxu0 0.0
  %44 = vmatprep.subr.mxu0 0.0
  %45 = vmatpush1.msra.mxu0 0.0
  %46 = vmatprep.subr.mxu0 0.0
  %47 = vmatpush1.msra.mxu0 0.0
  %48 = vmatprep.subr.mxu0 0.0
  %49 = vmatpush1.msra.mxu0 0.0
  %50 = vmatprep.subr.mxu0 0.0
  %51 = vmatpush1.msra.mxu0 0.0
  %52 = vmatprep.subr.mxu0 0.0
  %53 = vmatpush1.msra.mxu0 0.0
  %54 = vmatprep.subr.mxu0 0.0
  %55 = vmatpush1.msra.mxu0 0.0
  %56 = vmatprep.subr.mxu0 0.0
  %57 = vmatpush1.msra.mxu0 0.0
  %58 = vmatprep.subr.mxu0 0.0
  %59 = vmatpush1.msra.mxu0 0.0
  %60 = vmatprep.subr.mxu0 0.0
  %61 = vmatpush1.msra.mxu0 %v24
  %62 = vmatprep.subr.mxu0 0.0
  %63 = vmatpush1.msra.mxu0 %v23
  %64 = vmatprep.subr.mxu0 0.0
  %65 = vmatpush1.msra.mxu0 %v22
  %66 = vmatprep.subr.mxu0 0.0
  %67 = vmatpush1.msra.mxu0 %v21
  %68 = vmatprep.subr.mxu0 0.0
  %69 = vmatpush2.msra.mxu0 0.0
  %70 = vmatprep.subr.mxu0 0.0
  %71 = vmatpush2.msra.mxu0 0.0
  %72 = vmatprep.subr.mxu0 0.0
  %73 = vmatpush2.msra.mxu0 0.0
  %74 = vmatprep.subr.mxu0 0.0
  %75 = vmatpush2.msra.mxu0 0.0
  %76 = vmatprep.subr.mxu0 0.0
  %77 = vmatpush2.msra.mxu0 0.0
  %78 = vmatprep.subr.mxu0 0.0
  %79 = vmatpush2.msra.mxu0 0.0
  %80 = vmatprep.subr.mxu0 0.0
  %81 = vmatpush2.msra.mxu0 0.0
  %82 = vmatprep.subr.mxu0 0.0
  %83 = vmatpush2.msra.mxu0 0.0
  %84 = vmatprep.subr.mxu0 0.0
  %85 = vmatpush2.msra.mxu0 0.0
  %86 = vmatprep.subr.mxu0 0.0
  %87 = vmatpush2.msra.mxu0 0.0
  %88 = vmatprep.subr.mxu0 0.0
  %89 = vmatpush2.msra.mxu0 0.0
  %90 = vmatprep.subr.mxu0 0.0
  %91 = vmatpush2.msra.mxu0 0.0
  %92 = vmatprep.subr.mxu0 0.0
  %93 = vmatpush2.msra.mxu0 0.0
  %94 = vmatprep.subr.mxu0 0.0
  %95 = vmatpush2.msra.mxu0 0.0
  %96 = vmatprep.subr.mxu0 0.0
  %97 = vmatpush2.msra.mxu0 0.0
  %98 = vmatprep.subr.mxu0 0.0
  %99 = vmatpush2.msra.mxu0 0.0
  %100 = vmatprep.mubr.f32.mxu0 0.0
  %101 = vmatmul.mubr.f32.gmra.mxu0 %v34
  %v102 = vpop.f32.mrf.mxu0
  %v103 = vadd.f32 %v30, %v102
  %v104 = vpop.f32.mrf.mxu0
  %105 = vdwg.mxu0
  %v106 = vtanh.pop %v103
  %v107 = vld [vmem:[%s3] sm:$0xff]
  %v108 = vld [vmem:[%s3 + $0x8] sm:$0xff]
  %v109 = vld [vmem:[%s3 + $0x10] sm:$0xff]
  %v110 = vld [vmem:[%s3 + $0x18] sm:$0xff]
  %v111 = vld [vmem:[%s3 + $0x20] sm:$0xff]
  %v112 = vld [vmem:[%s3 + $0x28] sm:$0xff]
  %v113 = vld [vmem:[%s3 + $0x30] sm:$0xff]
  %v114 = vld [vmem:[%s3 + $0x38] sm:$0xff]
  %v115 = vld [vmem:[%s3 + $0x40] sm:$0xff]
  %v116 = vld [vmem:[%s3 + $0x48] sm:$0xff]
  %v117 = vld [vmem:[%s3 + $0x50] sm:$0xff]
  %v118 = vld [vmem:[%s3 + $0x58] sm:$0xff]
  %v119 = vld [vmem:[%s3 + $0x60] sm:$0xff]
  %v120 = vld [vmem:[%s3 + $0x68] sm:$0xff]
  %v121 = vld [vmem:[%s3 + $0x70] sm:$0xff]
  %v122 = vld [vmem:[%s3 + $0x78] sm:$0xff]
  %v123 = vld [vmem:[%s4] sm:$0x1]
  %v125 = vlaneseq
  %v126 = vshrl.u32 %v125, 7
  %v127 = vsub.s32 0, %v126
  %v128 = vrot.slane %v123, %v127
  %130 = vmatprep.subr.mxu0 0.0
  %131 = vmatpush1.msra.mxu0 %v122
  %132 = vmatprep.subr.mxu0 0.0
  %133 = vmatpush1.msra.mxu0 %v121
  %134 = vmatprep.subr.mxu0 0.0
  %135 = vmatpush1.msra.mxu0 %v120
  %136 = vmatprep.subr.mxu0 0.0
  %137 = vmatpush1.msra.mxu0 %v119
  %138 = vmatprep.subr.mxu0 0.0
  %139 = vmatpush1.msra.mxu0 %v118
  %140 = vmatprep.subr.mxu0 0.0
  %141 = vmatpush1.msra.mxu0 %v117
  %142 = vmatprep.subr.mxu0 0.0
  %143 = vmatpush1.msra.mxu0 %v116
  %144 = vmatprep.subr.mxu0 0.0
  %145 = vmatpush1.msra.mxu0 %v115
  %146 = vmatprep.subr.mxu0 0.0
  %147 = vmatpush1.msra.mxu0 %v114
  %148 = vmatprep.subr.mxu0 0.0
  %149 = vmatpush1.msra.mxu0 %v113
  %150 = vmatprep.subr.mxu0 0.0
  %151 = vmatpush1.msra.mxu0 %v112
  %152 = vmatprep.subr.mxu0 0.0
  %153 = vmatpush1.msra.mxu0 %v111
  %154 = vmatprep.subr.mxu0 0.0
  %155 = vmatpush1.msra.mxu0 %v110
  %156 = vmatprep.subr.mxu0 0.0
  %157 = vmatpush1.msra.mxu0 %v109
  %158 = vmatprep.subr.mxu0 0.0
  %159 = vmatpush1.msra.mxu0 %v108
  %160 = vmatprep.subr.mxu0 0.0
  %161 = vmatpush1.msra.mxu0 %v107
  %162 = vmatprep.subr.mxu0 0.0
  %163 = vmatpush2.msra.mxu0 0.0
  %164 = vmatprep.subr.mxu0 0.0
  %165 = vmatpush2.msra.mxu0 0.0
  %166 = vmatprep.subr.mxu0 0.0
  %167 = vmatpush2.msra.mxu0 0.0
  %168 = vmatprep.subr.mxu0 0.0
  %169 = vmatpush2.msra.mxu0 0.0
  %170 = vmatprep.subr.mxu0 0.0
  %171 = vmatpush2.msra.mxu0 0.0
  %172 = vmatprep.subr.mxu0 0.0
  %173 = vmatpush2.msra.mxu0 0.0
  %174 = vmatprep.subr.mxu0 0.0
  %175 = vmatpush2.msra.mxu0 0.0
  %176 = vmatprep.subr.mxu0 0.0
  %177 = vmatpush2.msra.mxu0 0.0
  %178 = vmatprep.subr.mxu0 0.0
  %179 = vmatpush2.msra.mxu0 0.0
  %180 = vmatprep.subr.mxu0 0.0
  %181 = vmatpush2.msra.mxu0 0.0
  %182 = vmatprep.subr.mxu0 0.0
  %183 = vmatpush2.msra.mxu0 0.0
  %184 = vmatprep.subr.mxu0 0.0
  %185 = vmatpush2.msra.mxu0 0.0
  %186 = vmatprep.subr.mxu0 0.0
  %187 = vmatpush2.msra.mxu0 0.0
  %188 = vmatprep.subr.mxu0 0.0
  %189 = vmatpush2.msra.mxu0 0.0
  %190 = vmatprep.subr.mxu0 0.0
  %191 = vmatpush2.msra.mxu0 0.0
  %192 = vmatprep.subr.mxu0 0.0
  %193 = vmatpush2.msra.mxu0 0.0
  %194 = vmatprep.mubr.f32.mxu0 0.0
  %195 = vmatmul.mubr.f32.gmra.mxu0 %v106
  %v196 = vpop.f32.mrf.mxu0
  %v197 = vadd.f32 %v128, %v196
  %v198 = vpop.f32.mrf.mxu0
  %199 = vdwg.mxu0
  %vm200 = vcmask 72704
  %201 = vst.msk [vmem:[%s5] sm:$0xff] %vm200, %v197
  // Predicated region
  $region22: #{gen_fc_forward.1} parent=0 // pred_check
    _
  $region23: #{gen_fc_forward.1} parent=0 // pred_check_branch
    %203 = sbr.rel (0) target = $region25
  $region24: #{gen_fc_forward.1} parent=0 // pred_region
    _
  $region25: #{gen_fc_forward.1} parent=0 // pred_fallthru
    _
  // Predicated region
  $region26: #{gen_fc_forward.1} parent=0 // pred_check
    _
  $region27: #{gen_fc_forward.1} parent=0 // pred_check_branch
    %205 = sbr.rel (0) target = $region29
  $region28: #{gen_fc_forward.1} parent=0 // pred_region
    _
  $region29: #{gen_fc_forward.1} parent=0 // pred_fallthru
    _

</llo_original>
